<compile_context>
chip_gen: v5e
topology: v5e:2x2
jax: 0.10.0
libtpu: 0.0.40
codegen_flags: <defaults>
</compile_context>

<pallas_src>
import math
import numpy as np

import jax
import jax.numpy as jnp
from jax import lax
from jax.experimental import pallas as pl
from jax.experimental.pallas import tpu as pltpu

# ---------------- configuration ----------------
HEAD_DIM = 16
NUM_HEADS = 2
HIDDEN = HEAD_DIM * NUM_HEADS          # 32
MEM_LEN = 16                           # memory_length == KeyLength
NUM_BASIS = 8
Q_LEN = 8
BATCH = 2
SIGMA_0 = 0.5
MU_0 = 0.5                             # > 0 -> simpler KL branch
SQRT_2PI = math.sqrt(2.0 * math.pi)
INV_SQRT_2PI = 1.0 / SQRT_2PI
# numerical guard against f32 cancellation in var = E[mu^2]-E[mu]^2; the exact
# value is always >= min(basis_sigma)^2 = 2.5e-5, so this clamp never binds
# mathematically (applied identically in kernel and reference).
VAR_EPS = 1e-6

GQ = NUM_HEADS * Q_LEN                 # 16 rows per batch in the (b,h,q) slab
ROWS = BATCH * GQ                      # 32 = total (b,h,q) rows
LANES = 128
BN = BATCH * NUM_BASIS                 # 16
OUT_ROWS = ROWS + BN                   # 48
CST_ROWS = 2 * ROWS + 2 * LANES        # 320

# ---- lane layout (single 128-lane "batch-block-diagonal" address space) ----
#   batch-b pvk block : lanes [b*64, b*64+64): pv at +0..31, pk/sqrt(dh) at +32..63
#   batch-b query emb : lanes  b*64 + 32 + h*16 .. +16   (aligned with pk head slices)
#   batch-b key rows  : lanes  64*(1-b) .. +31           (outside batch b's pvk block,
#                       so keys never contaminate same-batch logits; cross-batch
#                       contamination lands only in masked (-inf) logit entries)


# ---------------- buffers (Gaussian basis + G matrix), plain numpy glue ----------------
def make_basis_and_G():
    sigmas = [0.005, 0.01]
    n_per = NUM_BASIS // len(sigmas)
    mu_lin = np.linspace(0.0, 1.0, n_per)
    mu_grid, sig_grid = np.meshgrid(mu_lin, np.asarray(sigmas), indexing="ij")
    basis_mu = mu_grid.flatten()
    basis_sigma = sig_grid.flatten()

    # get_positions(memory_length even, padding=True)
    shift = 1.0 / (2 * MEM_LEN)
    positions = np.linspace(-0.5 + shift, 1.5 - shift, 2 * MEM_LEN)

    # compute_G_matrix: F[j, i] = N(positions[i]; mu_j, sigma_j)
    F = np.exp(-0.5 * ((positions[None, :] - basis_mu[:, None]) / basis_sigma[:, None]) ** 2) \
        / (basis_sigma[:, None] * SQRT_2PI)
    penalty = np.eye(NUM_BASIS) * 0.5
    G = F.T @ np.linalg.inv(F @ F.T + penalty)
    G = G[MEM_LEN // 2: -(MEM_LEN // 2), :]            # [MEM_LEN, NUM_BASIS]
    return (basis_mu.astype(np.float32),
            basis_sigma.astype(np.float32),
            G.astype(np.float32))


def init_params(rng):
    k1, k2, k3, k4, k5 = jax.random.split(rng, 5)
    scale = 0.1
    basis_mu, basis_sigma, Gs = make_basis_and_G()
    # NOTE: proj_query exists in __init__ but is never used in forward -> omitted.
    return dict(
        Wk=jax.random.normal(k1, (HIDDEN, HIDDEN), jnp.float32) * scale,
        Wv=jax.random.normal(k2, (HIDDEN, HIDDEN), jnp.float32) * scale,
        Wo=jax.random.normal(k3, (HIDDEN, HIDDEN), jnp.float32) * scale,
        Wm=jax.random.normal(k4, (MEM_LEN, MEM_LEN), jnp.float32) * scale,   # mask_net weight
        bm=jax.random.normal(k5, (MEM_LEN,), jnp.float32) * scale,           # mask_net bias
        Gs=jnp.asarray(Gs),
        basis_mu=jnp.asarray(basis_mu),
        basis_sigma=jnp.asarray(basis_sigma),
    )


# ---------------- one-time, host-side packed constants slab ----------------
def prepare_kernel_params(params):
    """Pack every constant the kernel needs into ONE [320, 128] lane-dense slab
    (done once, like torch buffers). Row blocks:
        rows   0- 31 : lanes 0-31  block-diag mask_net W
                       lanes 32-47 same-batch 0/1 logit mask      [32,16]
                       lanes 48-63 basis mu (tiled x2, row-bcast) [32,16]
                       lanes 64-79 basis mu^2+sigma^2             [32,16]
                       lanes 80-95 basis sigma^2                  [32,16]
                       lanes 96-127 block-diag Gs^T (rows 0-15)   [16,32]
        rows  32- 63 : mask_net bias, broadcast over all 128 lanes
        rows  64-191 : batch-block-diagonal [Wv^T | Wk^T/sqrt(dh)]   (wvk_bd)
        rows 192-319 : batch-block / head-split Wo^T                 (wo_split)
    """
    scale = 1.0 / math.sqrt(HEAD_DIM)
    Wm, bm = params["Wm"], params["bm"]
    Gs = params["Gs"]
    Wk, Wv, Wo = params["Wk"], params["Wv"], params["Wo"]
    bmu, bsig = params["basis_mu"], params["basis_sigma"]

    def blkdiag(a):
        z = jnp.zeros_like(a)
        return jnp.block([[a, z], [z, a]])

    wm_blk = blkdiag(Wm)                                               # [32,32]
    gst_blk = blkdiag(Gs.T)                                            # [16,32]
    mask01 = blkdiag(jnp.ones((GQ, NUM_BASIS), jnp.float32))           # [32,16]
    bmu16 = jnp.tile(bmu, (2,))                                        # [16]
    bm216 = jnp.tile(bmu ** 2 + bsig ** 2, (2,))
    bsig216 = jnp.tile(bsig ** 2, (2,))

    block_a = jnp.concatenate([
        wm_blk,
        mask01,
        jnp.broadcast_to(bmu16, (ROWS, 2 * NUM_BASIS)),
        jnp.broadcast_to(bm216, (ROWS, 2 * NUM_BASIS)),
        jnp.broadcast_to(bsig216, (ROWS, 2 * NUM_BASIS)),
        jnp.concatenate(
            [gst_blk, jnp.zeros((ROWS - BN, BATCH * MEM_LEN), jnp.float32)], axis=0),
    ], axis=1)                                                         # [32,128]

    block_b = jnp.broadcast_to(jnp.tile(bm, (2,))[:, None], (ROWS, LANES))   # [32,128]

    # fused value / (pre-scaled) key projection, batch-block-diagonal over lanes.
    wvk = jnp.concatenate([Wv.T, Wk.T * scale], axis=1)                # [32,64]
    block_c = jnp.zeros((LANES, LANES), jnp.float32)
    block_c = block_c.at[64:96, 0:64].set(wvk)        # batch 0: key lanes 64-95 -> block 0-63
    block_c = block_c.at[0:32, 64:128].set(wvk)       # batch 1: key lanes 0-31  -> block 64-127
    # (zero rows 32-63 / 96-127 kill the query-contaminated lanes of km/bmat)

    # Wo^T split by head: head-0 dims project into output lanes 0-31, head-1
    # dims into lanes 32-63; the wrapper adds the two row-halves (head merge).
    woT = Wo.T                                                         # [32,32]
    block_d = jnp.zeros((LANES, LANES), jnp.float32)
    block_d = block_d.at[0:16, 0:32].set(woT[0:16])
    block_d = block_d.at[16:32, 32:64].set(woT[16:32])
    block_d = block_d.at[64:80, 0:32].set(woT[0:16])
    block_d = block_d.at[80:96, 32:64].set(woT[16:32])

    cst = jnp.concatenate([block_a, block_b, block_c, block_d], axis=0)   # [320,128]
    return dict(cst=cst)


# ---------------- dynamic-input packing (one [32,128] slab) ----------------
def _build_dyn(query, key):
    """Rows r = b*16 + h*8 + q.
    Per row: query[b,h,q,:] at lanes b*64 + 32 + h*16 .. +16 (pk head slices),
             key[b, r%16, :] at lanes 64*(1-b) .. +31,
             all other lanes zero.  Built with static concatenations only."""
    zq = jnp.zeros((Q_LEN, HEAD_DIM), jnp.float32)
    zk = jnp.zeros((MEM_LEN, HIDDEN), jnp.float32)

    def qblock(qb):  # [H, Q, Dh] -> [16, 32] head-block-diagonal
        return jnp.concatenate([
            jnp.concatenate([qb[0], zq], axis=1),
            jnp.concatenate([zq, qb[1]], axis=1)], axis=0)

    row_b0 = jnp.concatenate([zk, qblock(query[0]), key[0], zk], axis=1)   # [16,128]
    row_b1 = jnp.concatenate([key[1], zk, zk, qblock(query[1])], axis=1)   # [16,128]
    return jnp.concatenate([row_b0, row_b1], axis=0)                       # [32,128]


# ---------------- Pallas kernel: fully fused forward, one grid step ----------------
def _lta_kernel(dyn_ref, cst_ref, out_ref):
    # dyn_ref : [32, 128]   packed queries + keys (lane layout above)
    # cst_ref : [320, 128]  packed constants slab (layout in prepare_kernel_params)
    # out_ref : [48, 128]   rows 0-31: lanes 0-63 projected context halves,
    #                                  lanes 64-127 KL (broadcast);
    #                       rows 32-47: B matrix (batch-block lanes)
    dyn = dyn_ref[...]

    wm      = cst_ref[0:ROWS, 0:32]                  # [32,32] block-diag mask_net W
    mask01  = cst_ref[0:ROWS, 32:48]                 # [32,16] 1 where col-batch == row-batch
    bmu16   = cst_ref[0:ROWS, 48:64]                 # [32,16]
    bm216   = cst_ref[0:ROWS, 64:80]                 # [32,16]
    bsig216 = cst_ref[0:ROWS, 80:96]                 # [32,16]
    gst     = cst_ref[0:BN, 96:128]                  # [16,32] block-diag Gs^T
    bmb     = cst_ref[ROWS:2 * ROWS, :]              # [32,128] mask_net bias (bcast)
    wvk_bd  = cst_ref[64:192, :]                     # [128,128]
    wo_spl  = cst_ref[192:320, :]                    # [128,128]

    # mask_type == 'affine': sigmoid(Linear over the length/sublane axis).
    # Query lanes pick up junk here; it is killed by the zero rows of wvk_bd.
    reg = jax.nn.sigmoid(jnp.dot(wm, dyn, preferred_element_type=jnp.float32) + bmb)
    km = dyn * reg                                                         # [32,128]

    # transform_to_continuous: B = Gs^T @ masked_key (per-batch lane blocks)
    bmat = jnp.dot(gst, km, preferred_element_type=jnp.float32)           # [16,128]

    # fused value / pre-scaled key projection into batch-block-diagonal lanes
    pvk = jnp.dot(bmat, wvk_bd, preferred_element_type=jnp.float32)       # [16,128]

    # attention logits for all (b,h,q) rows against all (b,n) basis columns in
    # one wide dot; cross-batch entries are exactly the contaminated ones and
    # get masked to -inf before the softmax.
    dn = (((1,), (1,)), ((), ()))                    # contract last dims
    logits = lax.dot_general(dyn, pvk, dn, preferred_element_type=jnp.float32)  # [32,16]
    logits = jnp.where(mask01 > 0.0, logits, -1e30)

    # softmax over the (batch-local) basis dim, vectorized over all 32 rows.
    # Exact reciprocal on purpose: KL's -log(var) amplifies the ~2^-12 error of
    # the approximate EUP reciprocal by ~1/var, which would risk the tolerance.
    m = jnp.max(logits, axis=-1, keepdims=True)
    e = jnp.exp(logits - m)
    p = e * pl.reciprocal(jnp.sum(e, axis=-1, keepdims=True), approx=False)

    mu = jnp.sum(p * bmu16, axis=-1, keepdims=True)                       # [32,1]
    var = jnp.sum(p * bm216, axis=-1, keepdims=True) - mu * mu
    var = jnp.maximum(var, VAR_EPS)

    # ContinuousSoftmax with Gaussian basis: r_j = N(mu; mu_j, var + sigma_j^2)
    s2 = var + bsig216                                                    # [32,16]
    inv_s = lax.rsqrt(s2)                                                 # EUP
    r = jnp.exp(-0.5 * (mu - bmu16) ** 2 * (inv_s * inv_s)) * (inv_s * INV_SQRT_2PI)
    r = r * mask01                                   # zero cross-batch entries

    # context for every (b,h,q) row (full pv vector of its batch), then the
    # head-split output projection; the head merge is a row add in the wrapper.
    ctx = jnp.dot(r, pvk, preferred_element_type=jnp.float32)             # [32,128]
    outw = jnp.dot(ctx, wo_spl, preferred_element_type=jnp.float32)       # [32,128], lanes 0-63

    # KL regularizer (mu_0 > 0 branch); /sigma_0^2 folded into a multiply
    ratio = var * (1.0 / (SIGMA_0 ** 2))
    kl = 0.5 * (ratio - jnp.log(ratio) - 1.0)                             # [32,1]

    lane = lax.broadcasted_iota(jnp.int32, (ROWS, LANES), 1)
    rows_val = jnp.where(lane < 2 * HIDDEN, outw,
                         jnp.broadcast_to(kl, (ROWS, LANES)))
    out_ref[0:ROWS, :] = rows_val                    # dense full-lane store
    out_ref[ROWS:OUT_ROWS, :] = bmat                 # dense full-lane store


def lta_forward(query, key, kparams):
    """Pallas forward. Returns (context, new_B_past, None, None, kl_reg)."""
    dyn = _build_dyn(query, key)

    out = pl.pallas_call(
        _lta_kernel,
        grid=(1,),                                   # single step: nothing to pipeline
        in_specs=[
            pl.BlockSpec((ROWS, LANES), lambda i: (0, 0)),
            pl.BlockSpec((CST_ROWS, LANES), lambda i: (0, 0)),
        ],
        out_specs=pl.BlockSpec((OUT_ROWS, LANES), lambda i: (0, 0)),
        out_shape=jax.ShapeDtypeStruct((OUT_ROWS, LANES), jnp.float32),
        compiler_params=pltpu.CompilerParams(dimension_semantics=("arbitrary",)),
    )(dyn, kparams["cst"])

    # Wrapper-side unpacking: tiny slices/adds on the single lane-dense slab.
    rows = out[0:ROWS].reshape(BATCH, NUM_HEADS, Q_LEN, LANES)
    # head merge: head-0 rows carry lanes 0-31, head-1 rows carry lanes 32-63
    context = rows[:, 0, :, 0:HIDDEN] + rows[:, 1, :, HIDDEN:2 * HIDDEN]   # [B,Q,D]
    kl_reg = out[0:ROWS, 2 * HIDDEN].reshape(BATCH, NUM_HEADS * Q_LEN)     # head-major
    brows = out[ROWS:OUT_ROWS].reshape(BATCH, NUM_BASIS, LANES)
    new_B_past = jnp.stack([brows[0, :, 64:64 + HIDDEN],                   # batch-0 key lanes
                            brows[1, :, 0:HIDDEN]], axis=0)                # batch-1 key lanes
    # use_sticky_memories=False -> new_past_attention_mu/sigma are None
    return context, new_B_past, None, None, kl_reg


# ---------------- pure-JAX reference (for a correctness check) ----------------
def lta_reference(query, key, params):
    bmu = params["basis_mu"]
    bsig = params["basis_sigma"]
    key_t = jnp.swapaxes(key, 1, 2)                                          # [B, D, L]
    reg = jax.nn.sigmoid(jnp.einsum("bdl,ml->bdm", key_t, params["Wm"]) + params["bm"])
    key_t = key_t * reg
    B = jnp.swapaxes(jnp.einsum("bdl,ln->bdn", key_t, params["Gs"]), 1, 2)   # [B, N, D]
    pk = jnp.einsum("bnd,ed->bne", B, params["Wk"])
    pv = jnp.einsum("bnd,ed->bne", B, params["Wv"])
    pk = pk.reshape(BATCH, NUM_BASIS, NUM_HEADS, HEAD_DIM).transpose(0, 2, 1, 3)
    pv = pv.reshape(BATCH, NUM_BASIS, NUM_HEADS, HEAD_DIM).transpose(0, 2, 3, 1)
    logits = jnp.einsum("bhqd,bhnd->bhqn", query / math.sqrt(HEAD_DIM), pk)
    p = jax.nn.softmax(logits, axis=-1)
    mu = p @ bmu                                                             # [B, H, Q]
    var = p @ (bmu ** 2 + bsig ** 2) - mu ** 2
    var = jnp.maximum(var, VAR_EPS)
    s2 = var[..., None] + (bsig ** 2)[None, None, None, :]
    r = jnp.exp(-0.5 * (mu[..., None] - bmu) ** 2 / s2) / (SQRT_2PI * jnp.sqrt(s2))
    context = jnp.einsum("bhdn,bhnq->bhdq", pv, r.transpose(0, 1, 3, 2))
    context = context.reshape(BATCH, HIDDEN, Q_LEN).transpose(0, 2, 1)
    context = jnp.einsum("bqd,ed->bqe", context, params["Wo"])
    ratio = var / (SIGMA_0 ** 2)
    kl = (0.5 * (ratio - jnp.log(ratio) - 1.0)).reshape(BATCH, -1)
    return context, B, kl


if __name__ == "__main__":
    rng = jax.random.PRNGKey(0)
    kq, kk, kp = jax.random.split(rng, 3)
    query = jax.random.normal(kq, (BATCH, NUM_HEADS, Q_LEN, HEAD_DIM), jnp.float32)
    key = jax.random.normal(kk, (BATCH, MEM_LEN, HIDDEN), jnp.float32)
    params = init_params(kp)
    kparams = prepare_kernel_params(params)          # one-time packed constants slab

    fwd = jax.jit(lta_forward)
    ctx, bpast, _, _, kl = fwd(query, key, kparams)
    jax.block_until_ready((ctx, bpast, kl))

    rctx, rbpast, rkl = lta_reference(query, key, params)
    assert jnp.allclose(ctx, rctx, atol=1e-4, rtol=1e-3), "context mismatch"
    assert jnp.allclose(bpast, rbpast, atol=1e-4, rtol=1e-3), "B_past mismatch"
    assert jnp.allclose(kl, rkl, atol=1e-4, rtol=1e-3), "kl mismatch"
    print("KERNEL_OK")
</pallas_src>

<mosaic_0001>
module attributes {stable_mosaic.version = 11 : i64} {
  func.func @_lta_kernel(%arg0: i32, %arg1: memref<32x128xf32, #tpu.memory_space<vmem>>, %arg2: memref<320x128xf32, #tpu.memory_space<vmem>>, %arg3: memref<48x128xf32, #tpu.memory_space<vmem>>) attributes {dimension_semantics = [#tpu.dimension_semantics<arbitrary>], iteration_bounds = array<i64: 1>, scalar_prefetch = 0 : i64, scratch_operands = 0 : i64, tpu.core_type = #tpu.core_type<tc>, window_params = [{pipeline_mode = #tpu.pipeline_mode<synchronous>, transform_indices = @transform_0, window_bounds = array<i64: 32, 128>}, {pipeline_mode = #tpu.pipeline_mode<synchronous>, transform_indices = @transform_1, window_bounds = array<i64: 320, 128>}, {pipeline_mode = #tpu.pipeline_mode<synchronous>, transform_indices = @transform_2, window_bounds = array<i64: 48, 128>}]} {
    %c0 = arith.constant 0 : index
    %c0_0 = arith.constant 0 : index
    %0 = vector.load %arg1[%c0, %c0_0] : memref<32x128xf32, #tpu.memory_space<vmem>>, vector<32x128xf32>
    %c0_1 = arith.constant 0 : index
    %c0_2 = arith.constant 0 : index
    %1 = vector.load %arg2[%c0_1, %c0_2] : memref<320x128xf32, #tpu.memory_space<vmem>>, vector<32x32xf32>
    %c0_3 = arith.constant 0 : index
    %c32 = arith.constant 32 : index
    %2 = vector.load %arg2[%c0_3, %c32] : memref<320x128xf32, #tpu.memory_space<vmem>>, vector<32x16xf32>
    %c0_4 = arith.constant 0 : index
    %c48 = arith.constant 48 : index
    %3 = vector.load %arg2[%c0_4, %c48] : memref<320x128xf32, #tpu.memory_space<vmem>>, vector<32x16xf32>
    %c0_5 = arith.constant 0 : index
    %c64 = arith.constant 64 : index
    %4 = vector.load %arg2[%c0_5, %c64] : memref<320x128xf32, #tpu.memory_space<vmem>>, vector<32x16xf32>
    %c0_6 = arith.constant 0 : index
    %c80 = arith.constant 80 : index
    %5 = vector.load %arg2[%c0_6, %c80] : memref<320x128xf32, #tpu.memory_space<vmem>>, vector<32x16xf32>
    %c0_7 = arith.constant 0 : index
    %c96 = arith.constant 96 : index
    %6 = vector.load %arg2[%c0_7, %c96] : memref<320x128xf32, #tpu.memory_space<vmem>>, vector<16x32xf32>
    %c32_8 = arith.constant 32 : index
    %c0_9 = arith.constant 0 : index
    %7 = vector.load %arg2[%c32_8, %c0_9] : memref<320x128xf32, #tpu.memory_space<vmem>>, vector<32x128xf32>
    %c64_10 = arith.constant 64 : index
    %c0_11 = arith.constant 0 : index
    %8 = vector.load %arg2[%c64_10, %c0_11] : memref<320x128xf32, #tpu.memory_space<vmem>>, vector<128x128xf32>
    %c192 = arith.constant 192 : index
    %c0_12 = arith.constant 0 : index
    %9 = vector.load %arg2[%c192, %c0_12] : memref<320x128xf32, #tpu.memory_space<vmem>>, vector<128x128xf32>
    %cst = arith.constant dense<0.000000e+00> : vector<32x128xf32>
    %10 = tpu.matmul %1, %0, %cst {dimension_numbers = #tpu.dot_dimension_numbers<[1], [0], [0], [1], [0, 0, 1, 1], [], []>} : vector<32x32xf32>, vector<32x128xf32>, vector<32x128xf32> -> vector<32x128xf32>
    %11 = arith.addf %10, %7 : vector<32x128xf32>
    %12 = arith.negf %11 : vector<32x128xf32>
    %13 = math.exp %12 : vector<32x128xf32>
    %cst_13 = arith.constant 1.000000e+00 : f32
    %14 = vector.broadcast %cst_13 : f32 to vector<32x128xf32>
    %15 = arith.addf %14, %13 : vector<32x128xf32>
    %16 = arith.divf %14, %15 : vector<32x128xf32>
    %17 = arith.mulf %0, %16 : vector<32x128xf32>
    %cst_14 = arith.constant dense<0.000000e+00> : vector<16x128xf32>
    %18 = tpu.matmul %6, %17, %cst_14 {dimension_numbers = #tpu.dot_dimension_numbers<[1], [0], [0], [1], [0, 0, 1, 1], [], []>} : vector<16x32xf32>, vector<32x128xf32>, vector<16x128xf32> -> vector<16x128xf32>
    %cst_15 = arith.constant dense<0.000000e+00> : vector<16x128xf32>
    %19 = tpu.matmul %18, %8, %cst_15 {dimension_numbers = #tpu.dot_dimension_numbers<[1], [0], [0], [1], [0, 0, 1, 1], [], []>} : vector<16x128xf32>, vector<128x128xf32>, vector<16x128xf32> -> vector<16x128xf32>
    %cst_16 = arith.constant dense<0.000000e+00> : vector<32x16xf32>
    %20 = tpu.matmul %0, %19, %cst_16 {dimension_numbers = #tpu.dot_dimension_numbers<[1], [1], [0], [0], [0, 0, 1, 0], [], []>} : vector<32x128xf32>, vector<16x128xf32>, vector<32x16xf32> -> vector<32x16xf32>
    %cst_17 = arith.constant 0.000000e+00 : f32
    %21 = vector.broadcast %cst_17 : f32 to vector<32x16xf32>
    %22 = arith.cmpf ogt, %2, %21 : vector<32x16xf32>
    %cst_18 = arith.constant -1.000000e+30 : f32
    %23 = vector.broadcast %cst_18 : f32 to vector<32x16xf32>
    %24 = arith.select %22, %20, %23 : vector<32x16xi1>, vector<32x16xf32>
    %cst_19 = arith.constant dense<0xFF800000> : vector<32xf32>
    %25 = vector.multi_reduction <maximumf>, %24, %cst_19 [1] : vector<32x16xf32> to vector<32xf32>
    %26 = vector.shape_cast %25 : vector<32xf32> to vector<32x1xf32>
    %27 = vector.broadcast %26 : vector<32x1xf32> to vector<32x16xf32>
    %28 = arith.subf %24, %27 : vector<32x16xf32>
    %29 = math.exp %28 : vector<32x16xf32>
    %cst_20 = arith.constant dense<0.000000e+00> : vector<32xf32>
    %30 = vector.multi_reduction <add>, %29, %cst_20 [1] : vector<32x16xf32> to vector<32xf32>
    %31 = vector.shape_cast %30 : vector<32xf32> to vector<32x1xf32>
    %32 = tpu.reciprocal %31 : vector<32x1xf32> -> vector<32x1xf32>
    %33 = vector.broadcast %32 : vector<32x1xf32> to vector<32x16xf32>
    %34 = arith.mulf %29, %33 : vector<32x16xf32>
    %35 = arith.mulf %34, %3 : vector<32x16xf32>
    %cst_21 = arith.constant dense<0.000000e+00> : vector<32xf32>
    %36 = vector.multi_reduction <add>, %35, %cst_21 [1] : vector<32x16xf32> to vector<32xf32>
    %37 = vector.shape_cast %36 : vector<32xf32> to vector<32x1xf32>
    %38 = arith.mulf %34, %4 : vector<32x16xf32>
    %cst_22 = arith.constant dense<0.000000e+00> : vector<32xf32>
    %39 = vector.multi_reduction <add>, %38, %cst_22 [1] : vector<32x16xf32> to vector<32xf32>
    %40 = vector.shape_cast %39 : vector<32xf32> to vector<32x1xf32>
    %41 = arith.mulf %37, %37 : vector<32x1xf32>
    %42 = arith.subf %40, %41 : vector<32x1xf32>
    %cst_23 = arith.constant 9.99999997E-7 : f32
    %43 = vector.broadcast %cst_23 : f32 to vector<32x1xf32>
    %44 = arith.maximumf %42, %43 : vector<32x1xf32>
    %45 = vector.broadcast %44 : vector<32x1xf32> to vector<32x16xf32>
    %46 = arith.addf %45, %5 : vector<32x16xf32>
    %47 = math.rsqrt %46 : vector<32x16xf32>
    %48 = vector.broadcast %37 : vector<32x1xf32> to vector<32x16xf32>
    %49 = arith.subf %48, %3 : vector<32x16xf32>
    %50 = arith.mulf %49, %49 : vector<32x16xf32>
    %cst_24 = arith.constant -5.000000e-01 : f32
    %51 = vector.broadcast %cst_24 : f32 to vector<32x16xf32>
    %52 = arith.mulf %51, %50 : vector<32x16xf32>
    %53 = arith.mulf %47, %47 : vector<32x16xf32>
    %54 = arith.mulf %52, %53 : vector<32x16xf32>
    %55 = math.exp %54 : vector<32x16xf32>
    %cst_25 = arith.constant 0.398942292 : f32
    %56 = vector.broadcast %cst_25 : f32 to vector<32x16xf32>
    %57 = arith.mulf %47, %56 : vector<32x16xf32>
    %58 = arith.mulf %55, %57 : vector<32x16xf32>
    %59 = arith.mulf %58, %2 : vector<32x16xf32>
    %cst_26 = arith.constant dense<0.000000e+00> : vector<32x128xf32>
    %60 = tpu.matmul %59, %19, %cst_26 {dimension_numbers = #tpu.dot_dimension_numbers<[1], [0], [0], [1], [0, 0, 1, 1], [], []>} : vector<32x16xf32>, vector<16x128xf32>, vector<32x128xf32> -> vector<32x128xf32>
    %cst_27 = arith.constant dense<0.000000e+00> : vector<32x128xf32>
    %61 = tpu.matmul %60, %9, %cst_27 {dimension_numbers = #tpu.dot_dimension_numbers<[1], [0], [0], [1], [0, 0, 1, 1], [], []>} : vector<32x128xf32>, vector<128x128xf32>, vector<32x128xf32> -> vector<32x128xf32>
    %cst_28 = arith.constant 4.000000e+00 : f32
    %62 = vector.broadcast %cst_28 : f32 to vector<32x1xf32>
    %63 = arith.mulf %44, %62 : vector<32x1xf32>
    %64 = math.log %63 : vector<32x1xf32>
    %65 = arith.subf %63, %64 : vector<32x1xf32>
    %cst_29 = arith.constant 1.000000e+00 : f32
    %66 = vector.broadcast %cst_29 : f32 to vector<32x1xf32>
    %67 = arith.subf %65, %66 : vector<32x1xf32>
    %cst_30 = arith.constant 5.000000e-01 : f32
    %68 = vector.broadcast %cst_30 : f32 to vector<32x1xf32>
    %69 = arith.mulf %68, %67 : vector<32x1xf32>
    %70 = tpu.iota {dimensions = array<i32: 1>} : vector<32x128xi32>
    %c64_i32 = arith.constant 64 : i32
    %71 = vector.broadcast %c64_i32 : i32 to vector<32x128xi32>
    %72 = arith.cmpi slt, %70, %71 : vector<32x128xi32>
    %73 = vector.shape_cast %69 : vector<32x1xf32> to vector<32x1xf32>
    %74 = vector.broadcast %73 : vector<32x1xf32> to vector<32x128xf32>
    %75 = arith.select %72, %61, %74 : vector<32x128xi1>, vector<32x128xf32>
    %c0_31 = arith.constant 0 : index
    %c0_32 = arith.constant 0 : index
    %76 = vector.load %arg3[%c0_31, %c0_32] : memref<48x128xf32, #tpu.memory_space<vmem>>, vector<32x128xf32>
    tpu.vector_store %arg3[%c0_31, %c0_32], %75 {strides = array<i32>} : memref<48x128xf32, #tpu.memory_space<vmem>>, vector<32x128xf32>,
    %c32_33 = arith.constant 32 : index
    %c0_34 = arith.constant 0 : index
    %77 = vector.load %arg3[%c32_33, %c0_34] : memref<48x128xf32, #tpu.memory_space<vmem>>, vector<16x128xf32>
    tpu.vector_store %arg3[%c32_33, %c0_34], %18 {strides = array<i32>} : memref<48x128xf32, #tpu.memory_space<vmem>>, vector<16x128xf32>,
    return
  }
  func.func @transform_0(%arg0: i32) -> (i32, i32) {
    %c0_i32 = arith.constant 0 : i32
    %c0_i32_0 = arith.constant 0 : i32
    %c0_i32_1 = arith.constant 0 : i32
    return %c0_i32, %c0_i32_0 : i32, i32
  }
  func.func @transform_1(%arg0: i32) -> (i32, i32) {
    %c0_i32 = arith.constant 0 : i32
    %c0_i32_0 = arith.constant 0 : i32
    %c0_i32_1 = arith.constant 0 : i32
    return %c0_i32, %c0_i32_0 : i32, i32
  }
  func.func @transform_2(%arg0: i32) -> (i32, i32) {
    %c0_i32 = arith.constant 0 : i32
    %c0_i32_0 = arith.constant 0 : i32
    %c0_i32_1 = arith.constant 0 : i32
    return %c0_i32, %c0_i32_0 : i32, i32
  }
}

</mosaic_0001>

<llo_original>
// kernel: squeeze.21
$region0: #{squeeze.21}
  %s0 = inlined_call_operand.vmem [shape: f32[32], index: 0, kind: input, shape index: {}]
  %s1 = inlined_call_operand.hbm [shape: f32[2,16], index: 1, kind: output, shape index: {}]
  $region1: #{squeeze.21} parent=0
    #allocation0 [shape = 'u8[1024]{0}', space=vmem, size = 0x400, scoped, tag = 'operand span for operand 1']
    #allocation1 [shape = 's32[1]{0}', space=sflag, size = 0x4, scoped, tag = 'scoped memory for squeeze.21']
    #allocation2 [shape = 'u8[4096]{0}', space=vmem, size = 0x1000, scoped, tag = 'scoped mem for output reshape']
    #allocation3 [shape = 'u8[4096]{0}', space=vmem, size = 0x1000, scoped, tag = 'scoped mem for input reshape']
    %2 = vsyncpa [#allocation1], 0
    %s4 = ssub.s32 2, 1
    %v5 = vld [vmem:[%s0] sm:%s4]
    %6 = vst [vmem:[#allocation3] sm:%s4] %v5
    %v7 = vld [vmem:[#allocation3] sm:$0x1]
    %vm8 = vcmask 130048
    %9 = vst.msk [vmem:[#allocation2] sm:$0x1] %vm8, %v7
    %v10 = vld [vmem:[#allocation3] sm:$0x1]
    %11 = vrot.lane.b32.xlu0 %v10, 112
    %v12 = vpop.permute.xlu0 %11
    %vm13 = vcmask 130048
    %s14 = scalar_lea.vmem [#allocation2], 1
    %15 = vst.msk [vmem:[%s14] sm:$0x1] %vm13, %v12
    %s17 = ssub.s32 4, 1
    %v18 = vld [vmem:[#allocation2] sm:%s17]
    %s20 = ssub.s32 4, 1
    %21 = vst [vmem:[#allocation0] sm:%s20] %v18
    %23 = vsyncadd [#allocation1], 0
    %s25 = sshll.u32 [#allocation0], 4
    %s26 = int_to_ptr.vmem [resolvable:$true] %s25
    %s27 = sshll.u32 %s1, 4
    %s28 = int_to_ptr.hbm [resolvable:$true] %s27
    %30 = dma.vmem_to_hbm [thread:$0]  %s26, 32, %s28, [#allocation1]
    %32 = dma.done [#allocation1], 32
    %33 = vsyncpa [#allocation1], 1

// kernel: lta_forward.1
$region0: #{lta_forward.1}
  #allocation0 [shape = 'u32[]', space=smem, size = 0x4, offset = 0x4, fixed_abs, tag = 'smem constant byte address 0x4 - core index']
  #allocation1 [shape = 'u32[72,128]{1,0:T(1,128)}', space=vmem, size = 0x9000, scoped, tag = 'internal scratch']
  %s0 = inlined_call_operand.vmem [shape: f32[32,128], index: 0, kind: input, shape index: {}]
  %s1 = inlined_call_operand.hbm [shape: f32[320,128], index: 1, kind: input, shape index: {}]
  %s2 = inlined_call_operand.vmem [shape: f32[48,128], index: 2, kind: output, shape index: {}]
  %s3 = sld [smem:[#allocation0]]
  $region22: #{lta_forward.1} parent=0
    _
  %s5 = ssub.s32 1, %s3
  %s6 = scalar_select 0, %s5, %s3
  $region1: #{lta_forward.1} parent=0
    #allocation2 [shape = 'u8[163840]{0}', space=vmem, size = 0x28000, scoped, tag = 'input window, operand 1, single buffered']
    #allocation3 [shape = 's32[1]{0}', space=sflag, size = 0x4, scoped, tag = 'scoped memory for lta_forward.1']
    %7 = vsyncpa [#allocation3], 0
    // Predicated region
    $region2: #{lta_forward.1} parent=1 // pred_check
      _
    $region3: #{lta_forward.1} parent=1 // pred_check_branch
      %9 = sbr.rel (0) target = $region5
    $region4: #{lta_forward.1} parent=1 // pred_region
      _
    $region5: #{lta_forward.1} parent=1 // pred_fallthru
      _
    // Predicated region
    $region6: #{lta_forward.1} parent=1 // pred_check
      _
    $region7: #{lta_forward.1} parent=1 // pred_check_branch
      %11 = sbr.rel (0) target = $region9
    $region8: #{lta_forward.1} parent=1 // pred_region
      %13 = vsyncadd [#allocation3], 0
      %s14 = sshll.u32 %s1, 4
      %s15 = int_to_ptr.hbm [resolvable:$true] %s14
      %s16 = sshll.u32 [#allocation2], 4
      %s17 = int_to_ptr.vmem [resolvable:$true] %s16
      %22 = dma.hbm_to_vmem [thread:$0]  %s15, 5120, %s17, [#allocation3], 128, 128, 8
    $region9: #{lta_forward.1} parent=1 // pred_fallthru
      _
    // Predicated region
    $region10: #{lta_forward.1} parent=1 // pred_check
      _
    $region11: #{lta_forward.1} parent=1 // pred_check_branch
      %24 = sbr.rel (0) target = $region13
    $region12: #{lta_forward.1} parent=1 // pred_region
      %26 = dma.done [#allocation3], 5120
    $region13: #{lta_forward.1} parent=1 // pred_fallthru
      _
    %v27 = vld [vmem:[%s0] sm:$0xff]
    %v28 = vld [vmem:[%s0 + $0x8] sm:$0xff]
    %v29 = vld [vmem:[%s0 + $0x10] sm:$0xff]
    %v30 = vld [vmem:[%s0 + $0x18] sm:$0xff]
    %v31 = vld [vmem:[#allocation2] sm:$0xff]
    %v32 = vld [vmem:[#allocation2 + $0x8] sm:$0xff]
    %v33 = vld [vmem:[#allocation2 + $0x10] sm:$0xff]
    %v34 = vld [vmem:[#allocation2 + $0x18] sm:$0xff]
    %v35 = vld [vmem:[#allocation2 + $0x20] sm:$0xff]
    %v36 = vld [vmem:[#allocation2 + $0x28] sm:$0xff]
    %v37 = vld [vmem:[#allocation2 + $0x30] sm:$0xff]
    %v38 = vld [vmem:[#allocation2 + $0x38] sm:$0xff]
    %v39 = vld [vmem:[#allocation2 + $0x40] sm:$0xff]
    %v40 = vld [vmem:[#allocation2 + $0x48] sm:$0xff]
    %v41 = vld [vmem:[#allocation2 + $0x50] sm:$0xff]
    %v42 = vld [vmem:[#allocation2 + $0x58] sm:$0xff]
    %v43 = vld [vmem:[#allocation2 + $0x60] sm:$0xff]
    %v44 = vld [vmem:[#allocation2 + $0x68] sm:$0xff]
    %v45 = vld [vmem:[#allocation2 + $0x70] sm:$0xff]
    %v46 = vld [vmem:[#allocation2 + $0x78] sm:$0xff]
    %v47 = vld [vmem:[#allocation2 + $0x80] sm:$0xff]
    %v48 = vld [vmem:[#allocation2 + $0x88] sm:$0xff]
    %v49 = vld [vmem:[#allocation2 + $0x90] sm:$0xff]
    %v50 = vld [vmem:[#allocation2 + $0x98] sm:$0xff]
    %v51 = vld [vmem:[#allocation2 + $0xa0] sm:$0xff]
    %v52 = vld [vmem:[#allocation2 + $0xa8] sm:$0xff]
    %v53 = vld [vmem:[#allocation2 + $0xb0] sm:$0xff]
    %v54 = vld [vmem:[#allocation2 + $0xb8] sm:$0xff]
    %v55 = vld [vmem:[#allocation2 + $0xc0] sm:$0xff]
    %v56 = vld [vmem:[#allocation2 + $0xc8] sm:$0xff]
    %v57 = vld [vmem:[#allocation2 + $0xd0] sm:$0xff]
    %v58 = vld [vmem:[#allocation2 + $0xd8] sm:$0xff]
    %v59 = vld [vmem:[#allocation2 + $0xe0] sm:$0xff]
    %v60 = vld [vmem:[#allocation2 + $0xe8] sm:$0xff]
    %v61 = vld [vmem:[#allocation2 + $0xf0] sm:$0xff]
    %v62 = vld [vmem:[#allocation2 + $0xf8] sm:$0xff]
    %v63 = vld [vmem:[#allocation2 + $0x100] sm:$0xff]
    %v64 = vld [vmem:[#allocation2 + $0x108] sm:$0xff]
    %v65 = vld [vmem:[#allocation2 + $0x110] sm:$0xff]
    %v66 = vld [vmem:[#allocation2 + $0x118] sm:$0xff]
    %v67 = vld [vmem:[#allocation2 + $0x120] sm:$0xff]
    %v68 = vld [vmem:[#allocation2 + $0x128] sm:$0xff]
    %v69 = vld [vmem:[#allocation2 + $0x130] sm:$0xff]
    %v70 = vld [vmem:[#allocation2 + $0x138] sm:$0xff]
    %vm71 = vcmask 261120
    %v73 = vsel %vm71, %v31, 0
    %v76 = vsel %vm71, %v32, 0
    %v79 = vsel %vm71, %v33, 0
    %v82 = vsel %vm71, %v34, 0
    %84 = vmatpush.msra.mxu0 0.0
    %85 = vmatpush.msra.mxu0 0.0
    %86 = vmatpush.msra.mxu0 0.0
    %87 = vmatpush.msra.mxu0 0.0
    %88 = vmatpush.msra.mxu0 0.0
    %89 = vmatpush.msra.mxu0 0.0
    %90 = vmatpush.msra.mxu0 0.0
    %91 = vmatpush.msra.mxu0 0.0
    %92 = vmatpush.msra.mxu0 0.0
    %93 = vmatpush.msra.mxu0 0.0
    %94 = vmatpush.msra.mxu0 0.0
    %95 = vmatpush.msra.mxu0 0.0
    %96 = vmatpush.msra.mxu0 %v30
    %97 = vmatpush.msra.mxu0 %v29
    %98 = vmatpush.msra.mxu0 %v28
    %99 = vmatpush.msra.mxu0 %v27
    %100 = vmatmul.f32.gmra.mxu0 %v73
    %v101 = vpop.f32.mrf.mxu0
    %v102 = vadd.f32 %v35, %v101
    %103 = vmatmul.f32.gmra.mxu0 %v76
    %v104 = vpop.f32.mrf.mxu0
    %v105 = vadd.f32 %v36, %v104
    %106 = vmatmul.f32.gmra.mxu0 %v79
    %v107 = vpop.f32.mrf.mxu0
    %v108 = vadd.f32 %v37, %v107
    %109 = vmatmul.f32.gmra.mxu0 %v82
    %v110 = vpop.f32.mrf.mxu0
    %v111 = vadd.f32 %v38, %v110
    %112 = vdwg.mxu0
    %v113 = vxor.u32 %v102, 2147483648
    %v114 = vxor.u32 %v105, 2147483648
    %v115 = vxor.u32 %v108, 2147483648
    %v116 = vxor.u32 %v111, 2147483648
    %v117 = vmul.f32 %v113, 1.442695
    %v118 = vpow.pop %v117
    %v119 = vmul.f32 %v114, 1.442695
    %v120 = vpow.pop %v119
    %v121 = vmul.f32 %v115, 1.442695
    %v122 = vpow.pop %v121
    %v123 = vmul.f32 %v116, 1.442695
    %v124 = vpow.pop %v123
    %v125 = vadd.f32 %v118, 1.0
    %v126 = vadd.f32 %v120, 1.0
    %v127 = vadd.f32 %v122, 1.0
    %v128 = vadd.f32 %v124, 1.0
    %v129 = vrcp.pop %v125
    %v130 = vmul.f32 %v125, %v129
    %v131 = vsub.f32 1.0, %v130
    %v132 = vmul.f32 %v129, %v131
    %v133 = vadd.f32 %v129, %v132
    %vm134 = vweird.f32 %v125
    %vm135 = vweird.f32 %v129
    %vm136 = vmor %vm134, %vm135
    %v137 = vsel %vm136, %v129, %v133
    %v138 = vand.u32 2147483647, %v125
    %vm139 = vcmp.eq.f32.partialorder %v138, 8.507059e+37
    %v140 = vand.u32 %v125, 2147483648
    %v141 = vor.u32 1.1754944e-38, %v140
    %v142 = vsel %vm139, %v141, %v137
    %v143 = vmul.f32 1.0, %v142
    %v144 = vrcp.pop %v126
    %v145 = vmul.f32 %v126, %v144
    %v146 = vsub.f32 1.0, %v145
    %v147 = vmul.f32 %v144, %v146
    %v148 = vadd.f32 %v144, %v147
    %vm149 = vweird.f32 %v126
    %vm150 = vweird.f32 %v144
    %vm151 = vmor %vm149, %vm150
    %v152 = vsel %vm151, %v144, %v148
    %v153 = vand.u32 2147483647, %v126
    %vm154 = vcmp.eq.f32.partialorder %v153, 8.507059e+37
    %v155 = vand.u32 %v126, 2147483648
    %v156 = vor.u32 1.1754944e-38, %v155
    %v157 = vsel %vm154, %v156, %v152
    %v158 = vmul.f32 1.0, %v157
    %v159 = vrcp.pop %v127
    %v160 = vmul.f32 %v127, %v159
    %v161 = vsub.f32 1.0, %v160
    %v162 = vmul.f32 %v159, %v161
    %v163 = vadd.f32 %v159, %v162
    %vm164 = vweird.f32 %v127
    %vm165 = vweird.f32 %v159
    %vm166 = vmor %vm164, %vm165
    %v167 = vsel %vm166, %v159, %v163
    %v168 = vand.u32 2147483647, %v127
    %vm169 = vcmp.eq.f32.partialorder %v168, 8.507059e+37
    %v170 = vand.u32 %v127, 2147483648
    %v171 = vor.u32 1.1754944e-38, %v170
    %v172 = vsel %vm169, %v171, %v167
    %v173 = vmul.f32 1.0, %v172
    %v174 = vrcp.pop %v128
    %v175 = vmul.f32 %v128, %v174
    %v176 = vsub.f32 1.0, %v175
    %v177 = vmul.f32 %v174, %v176
    %v178 = vadd.f32 %v174, %v177
    %vm179 = vweird.f32 %v128
    %vm180 = vweird.f32 %v174
    %vm181 = vmor %vm179, %vm180
    %v182 = vsel %vm181, %v174, %v178
    %v183 = vand.u32 2147483647, %v128
    %vm184 = vcmp.eq.f32.partialorder %v183, 8.507059e+37
    %v185 = vand.u32 %v128, 2147483648
    %v186 = vor.u32 1.1754944e-38, %v185
    %v187 = vsel %vm184, %v186, %v182
    %v188 = vmul.f32 1.0, %v187
    %v189 = vmul.f32 %v27, %v143
    %v190 = vmul.f32 %v28, %v158
    %v191 = vmul.f32 %v29, %v173
    %v192 = vmul.f32 %v30, %v188
    %193 = vrot.lane.b32.xlu0 %v31, 32
    %v194 = vpop.permute.xlu0 %193
    %195 = vrot.lane.b32.xlu0 %v32, 32
    %v196 = vpop.permute.xlu0 %195
    %v197 = vsel %vm71, %v194, 0
    %v199 = vsel %vm71, %v196, 0
    %201 = vmatpush.msra.mxu0 0.0
    %202 = vmatpush.msra.mxu0 0.0
    %203 = vmatpush.msra.mxu0 0.0
    %204 = vmatpush.msra.mxu0 0.0
    %205 = vmatpush.msra.mxu0 0.0
    %206 = vmatpush.msra.mxu0 0.0
    %207 = vmatpush.msra.mxu0 0.0
    %208 = vmatpush.msra.mxu0 0.0
    %209 = vmatpush.msra.mxu0 0.0
    %210 = vmatpush.msra.mxu0 0.0
    %211 = vmatpush.msra.mxu0 0.0
    %212 = vmatpush.msra.mxu0 0.0
    %213 = vmatpush.msra.mxu0 %v192
    %214 = vmatpush.msra.mxu0 %v191
    %215 = vmatpush.msra.mxu0 %v190
    %216 = vmatpush.msra.mxu0 %v189
    %217 = vmatmul.f32.gmra.mxu0 %v197
    %v218 = vpop.f32.mrf.mxu0
    %v219 = vadd.f32 0.0, %v218
    %220 = vmatmul.f32.gmra.mxu0 %v199
    %v221 = vpop.f32.mrf.mxu0
    %v222 = vadd.f32 0.0, %v221
    %223 = vdwg.mxu0
    %224 = vmatpush.msra.mxu0 %v54
    %225 = vmatpush.msra.mxu0 %v53
    %226 = vmatpush.msra.mxu0 %v52
    %227 = vmatpush.msra.mxu0 %v51
    %228 = vmatpush.msra.mxu0 %v50
    %229 = vmatpush.msra.mxu0 %v49
    %230 = vmatpush.msra.mxu0 %v48
    %231 = vmatpush.msra.mxu0 %v47
    %232 = vmatpush.msra.mxu0 %v46
    %233 = vmatpush.msra.mxu0 %v45
    %234 = vmatpush.msra.mxu0 %v44
    %235 = vmatpush.msra.mxu0 %v43
    %236 = vmatpush.msra.mxu0 %v42
    %237 = vmatpush.msra.mxu0 %v41
    %238 = vmatpush.msra.mxu0 %v40
    %239 = vmatpush.msra.mxu0 %v39
    %240 = vmatmul.f32.gmra.mxu0 %v219
    %v241 = vpop.f32.mrf.mxu0
    %v242 = vadd.f32 0.0, %v241
    %243 = vmatmul.f32.gmra.mxu0 %v222
    %v244 = vpop.f32.mrf.mxu0
    %v245 = vadd.f32 0.0, %v244
    %246 = vdwg.mxu0
    %247 = vmatpush.xpose.msra.mxu0 0.0
    %248 = vmatpush.xpose.msra.mxu0 0.0
    %249 = vmatpush.xpose.msra.mxu0 0.0
    %250 = vmatpush.xpose.msra.mxu0 0.0
    %251 = vmatpush.xpose.msra.mxu0 0.0
    %252 = vmatpush.xpose.msra.mxu0 0.0
    %253 = vmatpush.xpose.msra.mxu0 0.0
    %254 = vmatpush.xpose.msra.mxu0 0.0
    %255 = vmatpush.xpose.msra.mxu0 0.0
    %256 = vmatpush.xpose.msra.mxu0 0.0
    %257 = vmatpush.xpose.msra.mxu0 0.0
    %258 = vmatpush.xpose.msra.mxu0 0.0
    %259 = vmatpush.xpose.msra.mxu0 0.0
    %260 = vmatpush.xpose.msra.mxu0 0.0
    %261 = vmatpush.xpose.msra.mxu0 %v245
    %262 = vmatpush.xpose.msra.mxu0 %v242
    %263 = vmatmul.f32.gmra.mxu0 %v27
    %v264 = vpop.f32.mrf.mxu0
    %v265 = vadd.f32 0.0, %v264
    %266 = vmatmul.f32.gmra.mxu0 %v28
    %v267 = vpop.f32.mrf.mxu0
    %v268 = vadd.f32 0.0, %v267
    %269 = vmatmul.f32.gmra.mxu0 %v29
    %v270 = vpop.f32.mrf.mxu0
    %v271 = vadd.f32 0.0, %v270
    %272 = vmatmul.f32.gmra.mxu0 %v30
    %v273 = vpop.f32.mrf.mxu0
    %v274 = vadd.f32 0.0, %v273
    %275 = vdwg.mxu0
    %vm276 = vcmp.gt.f32.partialorder %v31, 0.0
    %vm277 = vcmp.gt.f32.partialorder %v32, 0.0
    %vm278 = vcmp.gt.f32.partialorder %v33, 0.0
    %vm279 = vcmp.gt.f32.partialorder %v34, 0.0
    %284 = vrot.lane.b32.xlu0 %v265, 32
    %v285 = vpop.permute.xlu0 %284
    %286 = vrot.lane.b32.xlu0 %v268, 32
    %v287 = vpop.permute.xlu0 %286
    %288 = vrot.lane.b32.xlu0 %v271, 32
    %v289 = vpop.permute.xlu0 %288
    %290 = vrot.lane.b32.xlu0 %v274, 32
    %v291 = vpop.permute.xlu0 %290
    %v296 = vsel %vm276, %v285, -1e+30
    %v297 = vsel %vm277, %v287, -1e+30
    %v298 = vsel %vm278, %v289, -1e+30
    %v299 = vsel %vm279, %v291, -1e+30
    %vm300 = vcmask 392448
    %v301 = vsel %vm300, %v296, -inf
    %302 = vmax.xlane.f32.xlu0 %v301
    %v303 = vpop.xlane.xlu0 %302
    %v304 = vsel %vm300, %v297, -inf
    %305 = vmax.xlane.f32.xlu0 %v304
    %v306 = vpop.xlane.xlu0 %305
    %v307 = vsel %vm300, %v298, -inf
    %308 = vmax.xlane.f32.xlu0 %v307
    %v309 = vpop.xlane.xlu0 %308
    %v310 = vsel %vm300, %v299, -inf
    %311 = vmax.xlane.f32.xlu0 %v310
    %v312 = vpop.xlane.xlu0 %311
    %v313 = vsub.f32 %v296, %v303
    %v314 = vsub.f32 %v297, %v306
    %v315 = vsub.f32 %v298, %v309
    %v316 = vsub.f32 %v299, %v312
    %v317 = vmul.f32 %v313, 1.442695
    %v318 = vpow.pop %v317
    %v319 = vmul.f32 %v314, 1.442695
    %v320 = vpow.pop %v319
    %v321 = vmul.f32 %v315, 1.442695
    %v322 = vpow.pop %v321
    %v323 = vmul.f32 %v316, 1.442695
    %v324 = vpow.pop %v323
    %329 = vrot.lane.b32.xlu0 %v318, 96
    %v330 = vpop.permute.xlu0 %329
    %331 = vrot.lane.b32.xlu0 %v320, 96
    %v332 = vpop.permute.xlu0 %331
    %333 = vrot.lane.b32.xlu0 %v322, 96
    %v334 = vpop.permute.xlu0 %333
    %335 = vrot.lane.b32.xlu0 %v324, 96
    %v336 = vpop.permute.xlu0 %335
    %vm341 = vcmask 130048
    %v342 = vsel %vm341, %v330, 0.0
    %343 = vadd.xlane.f32.xlu0 %v342
    %v344 = vpop.xlane.xlu0 %343
    %v345 = vsel %vm341, %v332, 0.0
    %346 = vadd.xlane.f32.xlu0 %v345
    %v347 = vpop.xlane.xlu0 %346
    %v348 = vsel %vm341, %v334, 0.0
    %349 = vadd.xlane.f32.xlu0 %v348
    %v350 = vpop.xlane.xlu0 %349
    %v351 = vsel %vm341, %v336, 0.0
    %352 = vadd.xlane.f32.xlu0 %v351
    %v353 = vpop.xlane.xlu0 %352
    %v354 = vrcp.pop %v344
    %v355 = vmul.f32 %v344, %v354
    %v356 = vsub.f32 1.0, %v355
    %v357 = vmul.f32 %v354, %v356
    %v358 = vadd.f32 %v354, %v357
    %vm359 = vweird.f32 %v344
    %vm360 = vweird.f32 %v354
    %vm361 = vmor %vm359, %vm360
    %v362 = vsel %vm361, %v354, %v358
    %v363 = vand.u32 2147483647, %v344
    %vm364 = vcmp.eq.f32.partialorder %v363, 8.507059e+37
    %v365 = vand.u32 %v344, 2147483648
    %v366 = vor.u32 1.1754944e-38, %v365
    %v367 = vsel %vm364, %v366, %v362
    %v368 = vrcp.pop %v347
    %v369 = vmul.f32 %v347, %v368
    %v370 = vsub.f32 1.0, %v369
    %v371 = vmul.f32 %v368, %v370
    %v372 = vadd.f32 %v368, %v371
    %vm373 = vweird.f32 %v347
    %vm374 = vweird.f32 %v368
    %vm375 = vmor %vm373, %vm374
    %v376 = vsel %vm375, %v368, %v372
    %v377 = vand.u32 2147483647, %v347
    %vm378 = vcmp.eq.f32.partialorder %v377, 8.507059e+37
    %v379 = vand.u32 %v347, 2147483648
    %v380 = vor.u32 1.1754944e-38, %v379
    %v381 = vsel %vm378, %v380, %v376
    %v382 = vrcp.pop %v350
    %v383 = vmul.f32 %v350, %v382
    %v384 = vsub.f32 1.0, %v383
    %v385 = vmul.f32 %v382, %v384
    %v386 = vadd.f32 %v382, %v385
    %vm387 = vweird.f32 %v350
    %vm388 = vweird.f32 %v382
    %vm389 = vmor %vm387, %vm388
    %v390 = vsel %vm389, %v382, %v386
    %v391 = vand.u32 2147483647, %v350
    %vm392 = vcmp.eq.f32.partialorder %v391, 8.507059e+37
    %v393 = vand.u32 %v350, 2147483648
    %v394 = vor.u32 1.1754944e-38, %v393
    %v395 = vsel %vm392, %v394, %v390
    %v396 = vrcp.pop %v353
    %v397 = vmul.f32 %v353, %v396
    %v398 = vsub.f32 1.0, %v397
    %v399 = vmul.f32 %v396, %v398
    %v400 = vadd.f32 %v396, %v399
    %vm401 = vweird.f32 %v353
    %vm402 = vweird.f32 %v396
    %vm403 = vmor %vm401, %vm402
    %v404 = vsel %vm403, %v396, %v400
    %v405 = vand.u32 2147483647, %v353
    %vm406 = vcmp.eq.f32.partialorder %v405, 8.507059e+37
    %v407 = vand.u32 %v353, 2147483648
    %v408 = vor.u32 1.1754944e-38, %v407
    %v409 = vsel %vm406, %v408, %v404
    %v410 = vmul.f32 %v318, %v367
    %v411 = vmul.f32 %v320, %v381
    %v412 = vmul.f32 %v322, %v395
    %v413 = vmul.f32 %v324, %v409
    %414 = vrot.lane.b32.xlu0 %v31, 112
    %v415 = vpop.permute.xlu0 %414
    %416 = vrot.lane.b32.xlu0 %v32, 112
    %v417 = vpop.permute.xlu0 %416
    %418 = vrot.lane.b32.xlu0 %v33, 112
    %v419 = vpop.permute.xlu0 %418
    %420 = vrot.lane.b32.xlu0 %v34, 112
    %v421 = vpop.permute.xlu0 %420
    %v426 = vmul.f32 %v410, %v415
    %v427 = vmul.f32 %v411, %v417
    %v428 = vmul.f32 %v412, %v419
    %v429 = vmul.f32 %v413, %v421
    %434 = vrot.lane.b32.xlu0 %v426, 96
    %v435 = vpop.permute.xlu0 %434
    %436 = vrot.lane.b32.xlu0 %v427, 96
    %v437 = vpop.permute.xlu0 %436
    %438 = vrot.lane.b32.xlu0 %v428, 96
    %v439 = vpop.permute.xlu0 %438
    %440 = vrot.lane.b32.xlu0 %v429, 96
    %v441 = vpop.permute.xlu0 %440
    %v446 = vsel %vm341, %v435, 0.0
    %447 = vadd.xlane.f32.xlu0 %v446
    %v448 = vpop.xlane.xlu0 %447
    %v449 = vsel %vm341, %v437, 0.0
    %450 = vadd.xlane.f32.xlu0 %v449
    %v451 = vpop.xlane.xlu0 %450
    %v452 = vsel %vm341, %v439, 0.0
    %453 = vadd.xlane.f32.xlu0 %v452
    %v454 = vpop.xlane.xlu0 %453
    %v455 = vsel %vm341, %v441, 0.0
    %456 = vadd.xlane.f32.xlu0 %v455
    %v457 = vpop.xlane.xlu0 %456
    %458 = vrot.lane.b32.xlu0 %v31, 96
    %v459 = vpop.permute.xlu0 %458
    %460 = vrot.lane.b32.xlu0 %v32, 96
    %v461 = vpop.permute.xlu0 %460
    %462 = vrot.lane.b32.xlu0 %v33, 96
    %v463 = vpop.permute.xlu0 %462
    %464 = vrot.lane.b32.xlu0 %v34, 96
    %v465 = vpop.permute.xlu0 %464
    %v470 = vmul.f32 %v410, %v459
    %v471 = vmul.f32 %v411, %v461
    %v472 = vmul.f32 %v412, %v463
    %v473 = vmul.f32 %v413, %v465
    %478 = vrot.lane.b32.xlu0 %v470, 96
    %v479 = vpop.permute.xlu0 %478
    %480 = vrot.lane.b32.xlu0 %v471, 96
    %v481 = vpop.permute.xlu0 %480
    %482 = vrot.lane.b32.xlu0 %v472, 96
    %v483 = vpop.permute.xlu0 %482
    %484 = vrot.lane.b32.xlu0 %v473, 96
    %v485 = vpop.permute.xlu0 %484
    %v490 = vsel %vm341, %v479, 0.0
    %491 = vadd.xlane.f32.xlu0 %v490
    %v492 = vpop.xlane.xlu0 %491
    %v493 = vsel %vm341, %v481, 0.0
    %494 = vadd.xlane.f32.xlu0 %v493
    %v495 = vpop.xlane.xlu0 %494
    %v496 = vsel %vm341, %v483, 0.0
    %497 = vadd.xlane.f32.xlu0 %v496
    %v498 = vpop.xlane.xlu0 %497
    %v499 = vsel %vm341, %v485, 0.0
    %500 = vadd.xlane.f32.xlu0 %v499
    %v501 = vpop.xlane.xlu0 %500
    %v502 = vmul.f32 %v448, %v448
    %v503 = vmul.f32 %v451, %v451
    %v504 = vmul.f32 %v454, %v454
    %v505 = vmul.f32 %v457, %v457
    %v506 = vsub.f32 %v492, %v502
    %v507 = vsub.f32 %v495, %v503
    %v508 = vsub.f32 %v498, %v504
    %v509 = vsub.f32 %v501, %v505
    %v510 = vmax.f32 %v506, 1e-06
    %v511 = vmax.f32 %v507, 1e-06
    %v512 = vmax.f32 %v508, 1e-06
    %v513 = vmax.f32 %v509, 1e-06
    %v514 = vadd.f32 %v510, %v31
    %v515 = vadd.f32 %v511, %v32
    %v516 = vadd.f32 %v512, %v33
    %v517 = vadd.f32 %v513, %v34
    %v518 = vrsqrt.pop %v514
    %v519 = vmul.f32 %v518, %v514
    %v520 = vmul.f32 %v519, %v518
    %v521 = vmul.f32 0.5, %v520
    %v522 = vsub.f32 1.5, %v521
    %v523 = vmul.f32 %v518, %v522
    %vm524 = vweird.f32 %v514
    %vm525 = vweird.f32 %v518
    %vm526 = vmor %vm524, %vm525
    %v527 = vsel %vm526, %v518, %v523
    %v528 = vrsqrt.pop %v515
    %v529 = vmul.f32 %v528, %v515
    %v530 = vmul.f32 %v529, %v528
    %v531 = vmul.f32 0.5, %v530
    %v532 = vsub.f32 1.5, %v531
    %v533 = vmul.f32 %v528, %v532
    %vm534 = vweird.f32 %v515
    %vm535 = vweird.f32 %v528
    %vm536 = vmor %vm534, %vm535
    %v537 = vsel %vm536, %v528, %v533
    %v538 = vrsqrt.pop %v516
    %v539 = vmul.f32 %v538, %v516
    %v540 = vmul.f32 %v539, %v538
    %v541 = vmul.f32 0.5, %v540
    %v542 = vsub.f32 1.5, %v541
    %v543 = vmul.f32 %v538, %v542
    %vm544 = vweird.f32 %v516
    %vm545 = vweird.f32 %v538
    %vm546 = vmor %vm544, %vm545
    %v547 = vsel %vm546, %v538, %v543
    %v548 = vrsqrt.pop %v517
    %v549 = vmul.f32 %v548, %v517
    %v550 = vmul.f32 %v549, %v548
    %v551 = vmul.f32 0.5, %v550
    %v552 = vsub.f32 1.5, %v551
    %v553 = vmul.f32 %v548, %v552
    %vm554 = vweird.f32 %v517
    %vm555 = vweird.f32 %v548
    %vm556 = vmor %vm554, %vm555
    %v557 = vsel %vm556, %v548, %v553
    %v558 = vsub.f32 %v448, %v31
    %v559 = vsub.f32 %v451, %v32
    %v560 = vsub.f32 %v454, %v33
    %v561 = vsub.f32 %v457, %v34
    %v562 = vmul.f32 %v558, %v558
    %v563 = vmul.f32 %v559, %v559
    %v564 = vmul.f32 %v560, %v560
    %v565 = vmul.f32 %v561, %v561
    %v566 = vmul.f32 %v562, -0.5
    %v567 = vmul.f32 %v563, -0.5
    %v568 = vmul.f32 %v564, -0.5
    %v569 = vmul.f32 %v565, -0.5
    %v570 = vmul.f32 %v527, %v527
    %v571 = vmul.f32 %v537, %v537
    %v572 = vmul.f32 %v547, %v547
    %v573 = vmul.f32 %v557, %v557
    %578 = vrot.lane.b32.xlu0 %v570, 96
    %v579 = vpop.permute.xlu0 %578
    %580 = vrot.lane.b32.xlu0 %v571, 96
    %v581 = vpop.permute.xlu0 %580
    %582 = vrot.lane.b32.xlu0 %v572, 96
    %v583 = vpop.permute.xlu0 %582
    %584 = vrot.lane.b32.xlu0 %v573, 96
    %v585 = vpop.permute.xlu0 %584
    %v590 = vmul.f32 %v566, %v579
    %v591 = vmul.f32 %v567, %v581
    %v592 = vmul.f32 %v568, %v583
    %v593 = vmul.f32 %v569, %v585
    %v594 = vmul.f32 %v590, 1.442695
    %v595 = vpow.pop %v594
    %v596 = vmul.f32 %v591, 1.442695
    %v597 = vpow.pop %v596
    %v598 = vmul.f32 %v592, 1.442695
    %v599 = vpow.pop %v598
    %v600 = vmul.f32 %v593, 1.442695
    %v601 = vpow.pop %v600
    %v602 = vmul.f32 %v527, 0.3989423
    %v603 = vmul.f32 %v537, 0.3989423
    %v604 = vmul.f32 %v547, 0.3989423
    %v605 = vmul.f32 %v557, 0.3989423
    %610 = vrot.lane.b32.xlu0 %v602, 96
    %v611 = vpop.permute.xlu0 %610
    %612 = vrot.lane.b32.xlu0 %v603, 96
    %v613 = vpop.permute.xlu0 %612
    %614 = vrot.lane.b32.xlu0 %v604, 96
    %v615 = vpop.permute.xlu0 %614
    %616 = vrot.lane.b32.xlu0 %v605, 96
    %v617 = vpop.permute.xlu0 %616
    %v622 = vmul.f32 %v595, %v611
    %v623 = vmul.f32 %v597, %v613
    %v624 = vmul.f32 %v599, %v615
    %v625 = vmul.f32 %v601, %v617
    %626 = vrot.lane.b32.xlu0 %v31, 16
    %v627 = vpop.permute.xlu0 %626
    %628 = vrot.lane.b32.xlu0 %v32, 16
    %v629 = vpop.permute.xlu0 %628
    %630 = vrot.lane.b32.xlu0 %v33, 16
    %v631 = vpop.permute.xlu0 %630
    %632 = vrot.lane.b32.xlu0 %v34, 16
    %v633 = vpop.permute.xlu0 %632
    %v638 = vmul.f32 %v622, %v627
    %v639 = vmul.f32 %v623, %v629
    %v640 = vmul.f32 %v624, %v631
    %v641 = vmul.f32 %v625, %v633
    %646 = vrot.lane.b32.xlu0 %v638, 80
    %v647 = vpop.permute.xlu0 %646
    %648 = vrot.lane.b32.xlu0 %v639, 80
    %v649 = vpop.permute.xlu0 %648
    %650 = vrot.lane.b32.xlu0 %v640, 80
    %v651 = vpop.permute.xlu0 %650
    %652 = vrot.lane.b32.xlu0 %v641, 80
    %v653 = vpop.permute.xlu0 %652
    %v654 = vsel %vm341, %v647, 0
    %v656 = vsel %vm341, %v649, 0
    %v658 = vsel %vm341, %v651, 0
    %v660 = vsel %vm341, %v653, 0
    %662 = vmatpush.msra.mxu0 0.0
    %663 = vmatpush.msra.mxu0 0.0
    %664 = vmatpush.msra.mxu0 0.0
    %665 = vmatpush.msra.mxu0 0.0
    %666 = vmatpush.msra.mxu0 0.0
    %667 = vmatpush.msra.mxu0 0.0
    %668 = vmatpush.msra.mxu0 0.0
    %669 = vmatpush.msra.mxu0 0.0
    %670 = vmatpush.msra.mxu0 0.0
    %671 = vmatpush.msra.mxu0 0.0
    %672 = vmatpush.msra.mxu0 0.0
    %673 = vmatpush.msra.mxu0 0.0
    %674 = vmatpush.msra.mxu0 0.0
    %675 = vmatpush.msra.mxu0 0.0
    %676 = vmatpush.msra.mxu0 %v245
    %677 = vmatpush.msra.mxu0 %v242
    %678 = vmatmul.f32.gmra.mxu0 %v654
    %v679 = vpop.f32.mrf.mxu0
    %v680 = vadd.f32 0.0, %v679
    %681 = vmatmul.f32.gmra.mxu0 %v656
    %v682 = vpop.f32.mrf.mxu0
    %v683 = vadd.f32 0.0, %v682
    %684 = vmatmul.f32.gmra.mxu0 %v658
    %v685 = vpop.f32.mrf.mxu0
    %v686 = vadd.f32 0.0, %v685
    %687 = vmatmul.f32.gmra.mxu0 %v660
    %v688 = vpop.f32.mrf.mxu0
    %v689 = vadd.f32 0.0, %v688
    %690 = vdwg.mxu0
    %691 = vmatpush.msra.mxu0 %v70
    %692 = vmatpush.msra.mxu0 %v69
    %693 = vmatpush.msra.mxu0 %v68
    %694 = vmatpush.msra.mxu0 %v67
    %695 = vmatpush.msra.mxu0 %v66
    %696 = vmatpush.msra.mxu0 %v65
    %697 = vmatpush.msra.mxu0 %v64
    %698 = vmatpush.msra.mxu0 %v63
    %699 = vmatpush.msra.mxu0 %v62
    %700 = vmatpush.msra.mxu0 %v61
    %701 = vmatpush.msra.mxu0 %v60
    %702 = vmatpush.msra.mxu0 %v59
    %703 = vmatpush.msra.mxu0 %v58
    %704 = vmatpush.msra.mxu0 %v57
    %705 = vmatpush.msra.mxu0 %v56
    %706 = vmatpush.msra.mxu0 %v55
    %707 = vmatmul.f32.gmra.mxu0 %v680
    %v708 = vpop.f32.mrf.mxu0
    %v709 = vadd.f32 0.0, %v708
    %710 = vmatmul.f32.gmra.mxu0 %v683
    %v711 = vpop.f32.mrf.mxu0
    %v712 = vadd.f32 0.0, %v711
    %713 = vmatmul.f32.gmra.mxu0 %v686
    %v714 = vpop.f32.mrf.mxu0
    %v715 = vadd.f32 0.0, %v714
    %716 = vmatmul.f32.gmra.mxu0 %v689
    %v717 = vpop.f32.mrf.mxu0
    %v718 = vadd.f32 0.0, %v717
    %719 = vdwg.mxu0
    %v720 = vmul.f32 %v510, 4.0
    %v721 = vmul.f32 %v511, 4.0
    %v722 = vmul.f32 %v512, 4.0
    %v723 = vmul.f32 %v513, 4.0
    %v724 = vlog2.pop %v720
    %v725 = vmul.f32 %v724, 0.6931472
    %v726 = vlog2.pop %v721
    %v727 = vmul.f32 %v726, 0.6931472
    %v728 = vlog2.pop %v722
    %v729 = vmul.f32 %v728, 0.6931472
    %v730 = vlog2.pop %v723
    %v731 = vmul.f32 %v730, 0.6931472
    %v732 = vsub.f32 %v720, %v725
    %v733 = vsub.f32 %v721, %v727
    %v734 = vsub.f32 %v722, %v729
    %v735 = vsub.f32 %v723, %v731
    %v736 = vsub.f32 %v732, 1.0
    %v737 = vsub.f32 %v733, 1.0
    %v738 = vsub.f32 %v734, 1.0
    %v739 = vsub.f32 %v735, 1.0
    %v740 = vmul.f32 %v736, 0.5
    %v741 = vmul.f32 %v737, 0.5
    %v742 = vmul.f32 %v738, 0.5
    %v743 = vmul.f32 %v739, 0.5
    %v744 = vlaneseq
    %v745 = vand.u32 %v744, 127
    %vm746 = vcmp.lt.s32.totalorder %v745, 64
    %v747 = vsel %vm746, %v709, %v740
    %v748 = vsel %vm746, %v712, %v741
    %v749 = vsel %vm746, %v715, %v742
    %v750 = vsel %vm746, %v718, %v743
    %751 = vst [vmem:[%s2] sm:$0xff] %v747
    %752 = vst [vmem:[%s2 + $0x8] sm:$0xff] %v748
    %753 = vst [vmem:[%s2 + $0x10] sm:$0xff] %v749
    %754 = vst [vmem:[%s2 + $0x18] sm:$0xff] %v750
    %755 = vst [vmem:[%s2 + $0x20] sm:$0xff] %v219
    %756 = vst [vmem:[%s2 + $0x28] sm:$0xff] %v222
    // Predicated region
    $region14: #{lta_forward.1} parent=1 // pred_check
      _
    $region15: #{lta_forward.1} parent=1 // pred_check_branch
      %758 = sbr.rel (0) target = $region17
    $region16: #{lta_forward.1} parent=1 // pred_region
      _
    $region17: #{lta_forward.1} parent=1 // pred_fallthru
      _
    // Predicated region
    $region18: #{lta_forward.1} parent=1 // pred_check
      _
    $region19: #{lta_forward.1} parent=1 // pred_check_branch
      %760 = sbr.rel (0) target = $region21
    $region20: #{lta_forward.1} parent=1 // pred_region
      _
    $region21: #{lta_forward.1} parent=1 // pred_fallthru
      _
    %761 = vsyncpa [#allocation3], 1

</llo_original>
